<compile_context>
chip_gen: v7x
topology: tpu7x:2x2x1
jax: 0.10.0
libtpu: 0.0.40
codegen_flags: <defaults>
</compile_context>

<pallas_src>
import jax
import jax.numpy as jnp
from jax import lax
from jax.experimental import pallas as pl
from jax.experimental.pallas import tpu as pltpu

_LANES = 128
_SUBLANES = 8


def _cdiv(a, b):
    return -(-a // b)


def _round_up(x, m):
    return _cdiv(x, m) * m


def _default_n_splits():
    # Two TensorCores per chip only on v7x-class hardware; elsewhere a second
    # split only adds a redundant init/finalize pass.
    try:
        kind = jax.devices()[0].device_kind.lower()
    except Exception:
        return 1
    return 2 if "v7" in kind else 1


def event_regression_loss_mae(y_pred, y_true, mask, *, max_tile_rows=1024,
                              n_splits=None):
    """Pallas implementation of EventRegressionLossMAE.forward."""
    B, P = y_pred.shape
    assert P == 2, "y_pred must have exactly 2 regression targets"
    assert mask.shape == y_true.shape
    assert y_true.shape[0] == B and y_true.shape[1] >= 2

    # ---- Wrapper-side layout plumbing (no FLOPs).
    # Drop dead columns (identity when C == 2), flatten, and present a
    # lane-dense (rows, 128) slab.  Padding is at most 127 elements (none when
    # 2*B % 128 == 0); padded mask entries are 0 so they contribute to neither
    # the numerator nor the denominator.
    yp_f = y_pred.reshape(-1)
    yt_f = y_true[:, :2].reshape(-1)
    m_f = mask[:, :2].reshape(-1)

    n = yp_f.shape[0]                      # 2 * B
    rem = (-n) % _LANES
    if rem:
        yp_f = jnp.pad(yp_f, (0, rem))
        yt_f = jnp.pad(yt_f, (0, rem))
        m_f = jnp.pad(m_f, (0, rem))
    rows = (n + rem) // _LANES
    yp2d = yp_f.reshape(rows, _LANES)
    yt2d = yt_f.reshape(rows, _LANES)
    m2d = m_f.reshape(rows, _LANES)

    # ---- Grid sizing: decouple tile size from padding; the few rows of grid
    # overhang are masked in-kernel instead of being streamed as zeros.
    if n_splits is None:
        n_splits = _default_n_splits()
    n_splits = max(1, min(n_splits, rows // _SUBLANES))

    steps = _cdiv(rows, n_splits * max_tile_rows)
    tile_r = _round_up(_cdiv(rows, n_splits * steps), _SUBLANES)
    grid_rows = n_splits * steps * tile_r
    need_row_mask = grid_rows != rows
    # Last block index whose start is still inside the array; clamping the
    # index_map to it guarantees every DMA starts in bounds.
    last_block = _cdiv(rows, tile_r) - 1

    def in_map(c, i):
        return (jnp.minimum(c * steps + i, last_block), 0)

    def kernel(yp_ref, yt_ref, m_ref, out_ref, num_acc, den_acc):
        c = pl.program_id(0)
        i = pl.program_id(1)

        @pl.when(i == 0)
        def _():
            num_acc[...] = jnp.zeros_like(num_acc)
            den_acc[...] = jnp.zeros_like(den_acc)

        # f32 accumulation regardless of input dtype (safe on v5e: no bf16 VPU).
        yp = yp_ref[...].astype(jnp.float32)
        yt = yt_ref[...].astype(jnp.float32)
        m = m_ref[...].astype(jnp.float32)

        num = jnp.abs(yt - yp) * m
        den = m
        if need_row_mask:
            # Zero the contribution of rows past the real array extent (ragged
            # last block / grid overhang).  jnp.where also protects against
            # NaN/Inf garbage in the out-of-bounds part of the block.
            start = (c * steps + i) * tile_r
            row = lax.broadcasted_iota(jnp.int32, (tile_r, _LANES), 0)
            valid = row < (rows - start)
            num = jnp.where(valid, num, 0.0)
            den = jnp.where(valid, den, 0.0)

        # Fold the (tile_r, 128) contribution into a single-vreg accumulator.
        # The reshape maps whole (8, 128) native tiles -> free; the sum over
        # the leading axis is pure VPU adds (no XLU, no full-tile RMW).
        num_acc[...] += num.reshape(-1, _SUBLANES, _LANES).sum(axis=0)
        den_acc[...] += den.reshape(-1, _SUBLANES, _LANES).sum(axis=0)

        # Finalize once per split: one-vreg cross-lane reduce + scalar stores.
        @pl.when(i == pl.num_programs(1) - 1)
        def _():
            out_ref[0, 0] = jnp.sum(num_acc[...])
            out_ref[0, 1] = jnp.sum(den_acc[...])

    partials = pl.pallas_call(
        kernel,
        out_shape=jax.ShapeDtypeStruct((n_splits, 2), jnp.float32),
        grid_spec=pltpu.PrefetchScalarGridSpec(
            num_scalar_prefetch=0,
            grid=(n_splits, steps),
            in_specs=[
                pl.BlockSpec((tile_r, _LANES), in_map),
                pl.BlockSpec((tile_r, _LANES), in_map),
                pl.BlockSpec((tile_r, _LANES), in_map),
            ],
            out_specs=pl.BlockSpec(
                (1, 2), lambda c, i: (c, 0),
                memory_space=pltpu.MemorySpace.SMEM,
            ),
            scratch_shapes=[
                pltpu.VMEM((_SUBLANES, _LANES), jnp.float32),  # numerator acc
                pltpu.VMEM((_SUBLANES, _LANES), jnp.float32),  # denominator acc
            ],
        ),
        compiler_params=pltpu.CompilerParams(
            # Leading axis: one split per TensorCore on v7x; inner axis is the
            # sequential streaming reduction over batch tiles.
            # TODO(synk): on v7x, verify TC sharding in a trace and switch the
            # leading axis to pltpu.CORE_PARALLEL if "parallel" does not shard.
            dimension_semantics=(pltpu.PARALLEL, pltpu.ARBITRARY),
        ),
    )(yp2d, yt2d, m2d)

    # Combine per-split (num, den) partials; final divide (tiny epilogue).
    # den stays exact in f32 far beyond practical batch sizes because counts
    # accumulate per lane-slot of the (8, 128) accumulator.
    return jnp.sum(partials[:, 0]) / jnp.sum(partials[:, 1])


def _reference(y_pred, y_true, mask):
    loss = jnp.abs(y_true[:, :2] - y_pred)
    m = mask[:, :2]
    return jnp.sum(loss * m) / jnp.sum(m)


if __name__ == "__main__":
    key = jax.random.PRNGKey(0)

    def run_case(B, C, n_splits):
        k1, k2, k3 = jax.random.split(jax.random.fold_in(key, 131 * B + C), 3)
        y_pred = jax.random.normal(k1, (B, 2), dtype=jnp.float32)
        y_true = jax.random.normal(k2, (B, C), dtype=jnp.float32)
        mask = (jax.random.uniform(k3, (B, C)) > 0.3).astype(jnp.float32)
        mask = mask.at[0, 0].set(1.0)  # guarantee a nonzero denominator
        out = event_regression_loss_mae(y_pred, y_true, mask, n_splits=n_splits)
        out = jax.block_until_ready(out)
        ref = _reference(y_pred, y_true, mask)
        assert jnp.allclose(out, ref, rtol=1e-5, atol=1e-5), (B, C, out, ref)

    run_case(8, 4, None)    # extra y_true/mask cols, lane padding, ragged block
    run_case(512, 2, 1)     # lane-aligned, exact grid, no masking path
    run_case(1024, 2, 2)    # two splits (v7x-style leading parallel axis)

    print("KERNEL_OK")
</pallas_src>

<mosaic_0001>
module attributes {stable_mosaic.version = 11 : i64} {
  func.func @kernel(%arg0: i32, %arg1: i32, %arg2: memref<8x128xf32, #tpu.memory_space<vmem>>, %arg3: memref<8x128xf32, #tpu.memory_space<vmem>>, %arg4: memref<8x128xf32, #tpu.memory_space<vmem>>, %arg5: memref<1x2xf32, #tpu.memory_space<smem>>, %arg6: memref<8x128xf32, #tpu.memory_space<vmem>>, %arg7: memref<8x128xf32, #tpu.memory_space<vmem>>) attributes {dimension_semantics = [#tpu.dimension_semantics<parallel>, #tpu.dimension_semantics<arbitrary>], iteration_bounds = array<i64: 1, 1>, scalar_prefetch = 0 : i64, scratch_operands = 2 : i64, tpu.core_type = #tpu.core_type<tc>, window_params = [{transform_indices = @transform_0, window_bounds = array<i64: 8, 128>}, {transform_indices = @transform_1, window_bounds = array<i64: 8, 128>}, {transform_indices = @transform_2, window_bounds = array<i64: 8, 128>}, {transform_indices = @transform_3, window_bounds = array<i64: 1, 2>}]} {
    %c0_i32 = arith.constant 0 : i32
    %0 = arith.cmpi eq, %arg1, %c0_i32 : i32
    %1 = arith.extui %0 : i1 to i32
    %c0_i32_0 = arith.constant 0 : i32
    %2 = arith.cmpi ne, %1, %c0_i32_0 : i32
    scf.if %2 {
      %cst_20 = arith.constant 0.000000e+00 : f32
      %33 = vector.broadcast %cst_20 : f32 to vector<8x128xf32>
      %c0_21 = arith.constant 0 : index
      %c0_22 = arith.constant 0 : index
      %34 = vector.load %arg6[%c0_21, %c0_22] : memref<8x128xf32, #tpu.memory_space<vmem>>, vector<8x128xf32>
      tpu.vector_store %arg6[%c0_21, %c0_22], %33 {strides = array<i32>} : memref<8x128xf32, #tpu.memory_space<vmem>>, vector<8x128xf32>,
      %cst_23 = arith.constant 0.000000e+00 : f32
      %35 = vector.broadcast %cst_23 : f32 to vector<8x128xf32>
      %c0_24 = arith.constant 0 : index
      %c0_25 = arith.constant 0 : index
      %36 = vector.load %arg7[%c0_24, %c0_25] : memref<8x128xf32, #tpu.memory_space<vmem>>, vector<8x128xf32>
      tpu.vector_store %arg7[%c0_24, %c0_25], %35 {strides = array<i32>} : memref<8x128xf32, #tpu.memory_space<vmem>>, vector<8x128xf32>,
    } else {
    }
    %c0 = arith.constant 0 : index
    %c0_1 = arith.constant 0 : index
    %3 = vector.load %arg2[%c0, %c0_1] : memref<8x128xf32, #tpu.memory_space<vmem>>, vector<8x128xf32>
    %c0_2 = arith.constant 0 : index
    %c0_3 = arith.constant 0 : index
    %4 = vector.load %arg3[%c0_2, %c0_3] : memref<8x128xf32, #tpu.memory_space<vmem>>, vector<8x128xf32>
    %c0_4 = arith.constant 0 : index
    %c0_5 = arith.constant 0 : index
    %5 = vector.load %arg4[%c0_4, %c0_5] : memref<8x128xf32, #tpu.memory_space<vmem>>, vector<8x128xf32>
    %6 = arith.subf %4, %3 : vector<8x128xf32>
    %7 = math.absf %6 : vector<8x128xf32>
    %8 = arith.mulf %7, %5 : vector<8x128xf32>
    %c1_i32 = arith.constant 1 : i32
    %9 = arith.muli %arg0, %c1_i32 : i32
    %10 = arith.addi %9, %arg1 : i32
    %c8_i32 = arith.constant 8 : i32
    %11 = arith.muli %10, %c8_i32 : i32
    %12 = tpu.iota {dimensions = array<i32: 0>} : vector<8x128xi32>
    %c1_i32_6 = arith.constant 1 : i32
    %13 = arith.subi %c1_i32_6, %11 : i32
    %14 = vector.broadcast %13 : i32 to vector<8x128xi32>
    %15 = arith.cmpi slt, %12, %14 : vector<8x128xi32>
    %cst = arith.constant 0.000000e+00 : f32
    %16 = vector.broadcast %cst : f32 to vector<8x128xf32>
    %17 = arith.select %15, %8, %16 : vector<8x128xi1>, vector<8x128xf32>
    %cst_7 = arith.constant 0.000000e+00 : f32
    %18 = vector.broadcast %cst_7 : f32 to vector<8x128xf32>
    %19 = arith.select %15, %5, %18 : vector<8x128xi1>, vector<8x128xf32>
    %c0_8 = arith.constant 0 : index
    %c0_9 = arith.constant 0 : index
    %20 = vector.load %arg6[%c0_8, %c0_9] : memref<8x128xf32, #tpu.memory_space<vmem>>, vector<8x128xf32>
    %21 = vector.shape_cast %17 : vector<8x128xf32> to vector<1x8x128xf32>
    %cst_10 = arith.constant dense<0.000000e+00> : vector<8x128xf32>
    %22 = vector.multi_reduction <add>, %21, %cst_10 [0] : vector<1x8x128xf32> to vector<8x128xf32>
    %23 = arith.addf %20, %22 : vector<8x128xf32>
    %c0_11 = arith.constant 0 : index
    %c0_12 = arith.constant 0 : index
    %24 = vector.load %arg6[%c0_11, %c0_12] : memref<8x128xf32, #tpu.memory_space<vmem>>, vector<8x128xf32>
    tpu.vector_store %arg6[%c0_11, %c0_12], %23 {strides = array<i32>} : memref<8x128xf32, #tpu.memory_space<vmem>>, vector<8x128xf32>,
    %c0_13 = arith.constant 0 : index
    %c0_14 = arith.constant 0 : index
    %25 = vector.load %arg7[%c0_13, %c0_14] : memref<8x128xf32, #tpu.memory_space<vmem>>, vector<8x128xf32>
    %26 = vector.shape_cast %19 : vector<8x128xf32> to vector<1x8x128xf32>
    %cst_15 = arith.constant dense<0.000000e+00> : vector<8x128xf32>
    %27 = vector.multi_reduction <add>, %26, %cst_15 [0] : vector<1x8x128xf32> to vector<8x128xf32>
    %28 = arith.addf %25, %27 : vector<8x128xf32>
    %c0_16 = arith.constant 0 : index
    %c0_17 = arith.constant 0 : index
    %29 = vector.load %arg7[%c0_16, %c0_17] : memref<8x128xf32, #tpu.memory_space<vmem>>, vector<8x128xf32>
    tpu.vector_store %arg7[%c0_16, %c0_17], %28 {strides = array<i32>} : memref<8x128xf32, #tpu.memory_space<vmem>>, vector<8x128xf32>,
    %c0_i32_18 = arith.constant 0 : i32
    %30 = arith.cmpi eq, %arg1, %c0_i32_18 : i32
    %31 = arith.extui %30 : i1 to i32
    %c0_i32_19 = arith.constant 0 : i32
    %32 = arith.cmpi ne, %31, %c0_i32_19 : i32
    scf.if %32 {
      %c0_20 = arith.constant 0 : index
      %c0_21 = arith.constant 0 : index
      %33 = vector.load %arg6[%c0_20, %c0_21] : memref<8x128xf32, #tpu.memory_space<vmem>>, vector<8x128xf32>
      %34 = vector.shape_cast %33 : vector<8x128xf32> to vector<1x8x128xf32>
      %cst_22 = arith.constant dense<0.000000e+00> : vector<1xf32>
      %35 = vector.multi_reduction <add>, %34, %cst_22 [1, 2] : vector<1x8x128xf32> to vector<1xf32>
      %36 = vector.shape_cast %35 : vector<1xf32> to vector<1x1x1xf32>
      %37 = vector.extract %36[0, 0, 0] : f32 from vector<1x1x1xf32>
      %c0_23 = arith.constant 0 : index
      %c0_24 = arith.constant 0 : index
      %38 = memref.load %arg5[%c0_23, %c0_24] : memref<1x2xf32, #tpu.memory_space<smem>>
      memref.store %37, %arg5[%c0_23, %c0_24] : memref<1x2xf32, #tpu.memory_space<smem>>
      %c0_25 = arith.constant 0 : index
      %c0_26 = arith.constant 0 : index
      %39 = vector.load %arg7[%c0_25, %c0_26] : memref<8x128xf32, #tpu.memory_space<vmem>>, vector<8x128xf32>
      %40 = vector.shape_cast %39 : vector<8x128xf32> to vector<1x8x128xf32>
      %cst_27 = arith.constant dense<0.000000e+00> : vector<1xf32>
      %41 = vector.multi_reduction <add>, %40, %cst_27 [1, 2] : vector<1x8x128xf32> to vector<1xf32>
      %42 = vector.shape_cast %41 : vector<1xf32> to vector<1x1x1xf32>
      %43 = vector.extract %42[0, 0, 0] : f32 from vector<1x1x1xf32>
      %c0_28 = arith.constant 0 : index
      %c1 = arith.constant 1 : index
      %44 = memref.load %arg5[%c0_28, %c1] : memref<1x2xf32, #tpu.memory_space<smem>>
      memref.store %43, %arg5[%c0_28, %c1] : memref<1x2xf32, #tpu.memory_space<smem>>
    } else {
    }
    return
  }
  func.func @transform_0(%arg0: i32, %arg1: i32) -> (i32, i32) {
    %c1_i32 = arith.constant 1 : i32
    %0 = arith.muli %arg0, %c1_i32 : i32
    %1 = arith.addi %0, %arg1 : i32
    %c0_i32 = arith.constant 0 : i32
    %2 = arith.minsi %1, %c0_i32 : i32
    %c0_i32_0 = arith.constant 0 : i32
    %c0_i32_1 = arith.constant 0 : i32
    return %2, %c0_i32_0 : i32, i32
  }
  func.func @transform_1(%arg0: i32, %arg1: i32) -> (i32, i32) {
    %c1_i32 = arith.constant 1 : i32
    %0 = arith.muli %arg0, %c1_i32 : i32
    %1 = arith.addi %0, %arg1 : i32
    %c0_i32 = arith.constant 0 : i32
    %2 = arith.minsi %1, %c0_i32 : i32
    %c0_i32_0 = arith.constant 0 : i32
    %c0_i32_1 = arith.constant 0 : i32
    return %2, %c0_i32_0 : i32, i32
  }
  func.func @transform_2(%arg0: i32, %arg1: i32) -> (i32, i32) {
    %c1_i32 = arith.constant 1 : i32
    %0 = arith.muli %arg0, %c1_i32 : i32
    %1 = arith.addi %0, %arg1 : i32
    %c0_i32 = arith.constant 0 : i32
    %2 = arith.minsi %1, %c0_i32 : i32
    %c0_i32_0 = arith.constant 0 : i32
    %c0_i32_1 = arith.constant 0 : i32
    return %2, %c0_i32_0 : i32, i32
  }
  func.func @transform_3(%arg0: i32, %arg1: i32) -> (i32, i32) {
    %c0_i32 = arith.constant 0 : i32
    %c0_i32_0 = arith.constant 0 : i32
    return %arg0, %c0_i32 : i32, i32
  }
}

</mosaic_0001>

<llo_original>
// kernel: tpu_custom_call.1
$region0: #{tpu_custom_call.1}
  #allocation0 [shape = 'u32[]', space=smem, size = 0x4, offset = 0x4, fixed_abs, tag = 'smem constant byte address 0x4 - core index']
  #allocation1 [shape = 'u32[144,128]{1,0:T(1,128)}', space=vmem, size = 0x12000, scoped, tag = 'internal scratch']
  #allocation2 [shape = 'f32[8,128]{1,0:T(8,128)}', space=vmem, size = 0x1000, scoped, tag = 'scratch operand']
  #allocation3 [shape = 'f32[8,128]{1,0:T(8,128)}', space=vmem, size = 0x1000, scoped, tag = 'scratch operand']
  %s0 = inlined_call_operand.hbm [shape: f32[1,128], index: 0, kind: input, shape index: {}]
  %s1 = inlined_call_operand.vmem [shape: f32[1,128], index: 1, kind: input, shape index: {}]
  %s2 = inlined_call_operand.vmem [shape: f32[1,128], index: 2, kind: input, shape index: {}]
  %s3 = inlined_call_operand.hbm [shape: f32[1,2], index: 3, kind: output, shape index: {}]
  %s4 = sld [smem:[#allocation0]]
  $region34: #{tpu_custom_call.1} parent=0
    _
  %s6 = ssub.s32 1, %s4
  %s7 = scalar_select 0, %s6, %s4
  $region1: #{tpu_custom_call.1} parent=0
    #allocation4 [shape = 'u8[4096]{0}', space=vmem, size = 0x1000, scoped, tag = 'input window, operand 0, single buffered']
    #allocation5 [shape = 's32[1]{0}', space=sflag, size = 0x4, scoped, tag = 'scoped memory for tpu_custom_call.1']
    #allocation6 [shape = 's32[1]{0}', space=sflag, size = 0x4, scoped, tag = 'scoped memory for tpu_custom_call.1']
    #allocation7 [shape = 'u8[512]{0}', space=smem, size = 0x200, scoped, tag = 'output window, operand 0, single buffered']
    %8 = vsyncpa [#allocation5], 0
    %9 = vsyncpa [#allocation6], 0
    // Predicated region
    $region2: #{tpu_custom_call.1} parent=1 // pred_check
      _
    $region3: #{tpu_custom_call.1} parent=1 // pred_check_branch
      %11 = sbr.rel (0) target = $region5
    $region4: #{tpu_custom_call.1} parent=1 // pred_region
      %s12 = sadd.s32 0, 0
      %p13 = scmp.lt.s32.totalorder %s12, 0
      %s14 = scalar_select %p13, %s12, 0
      %s15 = smul.u32 8, %s14
      %s16 = ssub.s32 1, %s15
      %s17 = smul.u32 16, %s16
      %s19 = ssub.s32 128, %s17
      %20 = vsyncadd [#allocation5], %s19
      %p21 = scmp.ne.s32.totalorder 0, %s17
      %s22 = smul.addr %s15, 16
      %s23 = scalar_lea.hbm %s0, %s22
      %s24 = sshll.u32 [#allocation4], 4
      %s25 = int_to_ptr.vmem [resolvable:$true] %s24
      %s26 = sshll.u32 %s16, 4
      %30 = dma.hbm_to_vmem [thread:$0]  (%p21), %s23, %s26, %s25, [#allocation5], 16, 16, 1
    $region5: #{tpu_custom_call.1} parent=1 // pred_fallthru
      _
    // Predicated region
    $region6: #{tpu_custom_call.1} parent=1 // pred_check
      _
    $region7: #{tpu_custom_call.1} parent=1 // pred_check_branch
      %32 = sbr.rel (0) target = $region9
    $region8: #{tpu_custom_call.1} parent=1 // pred_region
      %s33 = sadd.s32 0, 0
      %p34 = scmp.lt.s32.totalorder %s33, 0
      %s35 = scalar_select %p34, %s33, 0
      %s36 = smul.u32 8, %s35
      %s37 = ssub.s32 1, %s36
      %s38 = smul.u32 16, %s37
      %p39 = scmp.lt.s32.totalorder %s36, 0
      %s40 = scalar_select %p39, %s36, 0
      %s41 = scalar_lea.vmem %s1, %s40
      %s42 = sadd.s32 0, 0
      %p43 = scmp.lt.s32.totalorder %s42, 0
      %s44 = scalar_select %p43, %s42, 0
      %s45 = smul.u32 8, %s44
      %s46 = ssub.s32 1, %s45
      %s47 = smul.u32 16, %s46
    $region9: #{tpu_custom_call.1} parent=1 // pred_fallthru
      _
    // Predicated region
    $region10: #{tpu_custom_call.1} parent=1 // pred_check
      _
    $region11: #{tpu_custom_call.1} parent=1 // pred_check_branch
      %49 = sbr.rel (0) target = $region13
    $region12: #{tpu_custom_call.1} parent=1 // pred_region
      %s50 = sadd.s32 0, 0
      %p51 = scmp.lt.s32.totalorder %s50, 0
      %s52 = scalar_select %p51, %s50, 0
      %s53 = smul.u32 8, %s52
      %s54 = ssub.s32 1, %s53
      %s55 = smul.u32 16, %s54
      %p56 = scmp.lt.s32.totalorder %s53, 0
      %s57 = scalar_select %p56, %s53, 0
      %s58 = scalar_lea.vmem %s2, %s57
      %s59 = sadd.s32 0, 0
      %p60 = scmp.lt.s32.totalorder %s59, 0
      %s61 = scalar_select %p60, %s59, 0
      %s62 = smul.u32 8, %s61
      %s63 = ssub.s32 1, %s62
      %s64 = smul.u32 16, %s63
    $region13: #{tpu_custom_call.1} parent=1 // pred_fallthru
      _
    // Predicated region
    $region14: #{tpu_custom_call.1} parent=1 // pred_check
      _
    $region15: #{tpu_custom_call.1} parent=1 // pred_check_branch
      %66 = sbr.rel (0) target = $region17
    $region16: #{tpu_custom_call.1} parent=1 // pred_region
      %67 = dma.done [#allocation5], 128
    $region17: #{tpu_custom_call.1} parent=1 // pred_fallthru
      _
    %s68 = sadd.s32 0, 0
    %p69 = scmp.lt.s32.totalorder %s68, 0
    %s70 = scalar_select %p69, %s68, 0
    %s71 = smul.u32 8, %s70
    %s72 = ssub.s32 1, %s71
    %s73 = smul.u32 16, %s72
    %p74 = scmp.lt.s32.totalorder %s71, 0
    %s75 = scalar_select %p74, %s71, 0
    %s76 = scalar_lea.vmem %s1, %s75
    %s77 = sadd.s32 0, 0
    %p78 = scmp.lt.s32.totalorder %s77, 0
    %s79 = scalar_select %p78, %s77, 0
    %s80 = smul.u32 8, %s79
    %s81 = ssub.s32 1, %s80
    %s82 = smul.u32 16, %s81
    %p83 = scmp.lt.s32.totalorder %s80, 0
    %s84 = scalar_select %p83, %s80, 0
    %s85 = scalar_lea.vmem %s2, %s84
    %s86 = sadd.s32 0, 0
    %p87 = scmp.lt.s32.totalorder %s86, 0
    %s88 = scalar_select %p87, %s86, 0
    %s89 = smul.u32 8, %s88
    %s90 = ssub.s32 1, %s89
    %s91 = smul.u32 16, %s90
    %s92 = sadd.s32 0, 0
    %p93 = scmp.lt.s32.totalorder %s92, 0
    %s94 = scalar_select %p93, %s92, 0
    %s95 = smul.u32 8, %s94
    %s96 = ssub.s32 1, %s95
    %s97 = smul.u32 16, %s96
    %p98 = scmp.lt.s32.totalorder %s95, 0
    %s99 = scalar_select %p98, %s95, 0
    %s100 = scalar_lea.vmem %s1, %s99
    %s101 = sadd.s32 0, 0
    %p102 = scmp.lt.s32.totalorder %s101, 0
    %s103 = scalar_select %p102, %s101, 0
    %s104 = smul.u32 8, %s103
    %s105 = ssub.s32 1, %s104
    %s106 = smul.u32 16, %s105
    %s107 = sadd.s32 0, 0
    %p108 = scmp.lt.s32.totalorder %s107, 0
    %s109 = scalar_select %p108, %s107, 0
    %s110 = smul.u32 8, %s109
    %s111 = ssub.s32 1, %s110
    %s112 = smul.u32 16, %s111
    %p113 = scmp.lt.s32.totalorder %s110, 0
    %s114 = scalar_select %p113, %s110, 0
    %s115 = scalar_lea.vmem %s2, %s114
    %s116 = sadd.s32 0, 0
    %p117 = scmp.lt.s32.totalorder %s116, 0
    %s118 = scalar_select %p117, %s116, 0
    %s119 = smul.u32 8, %s118
    %s120 = ssub.s32 1, %s119
    %s121 = smul.u32 16, %s120
    %p122 = scmp.eq.s32.totalorder 0, 0
    // Predicated region
    $region18: #{tpu_custom_call.1} parent=1 // pred_check
      %p123 = pneg %p122
    $region19: #{tpu_custom_call.1} parent=1 // pred_check_branch
      %125 = sbr.rel (%p123) target = $region21
    $region20: #{tpu_custom_call.1} parent=1 // pred_region
      %126 = vst [vmem:[#allocation2] sm:$0xff] 0.0
      %127 = vst [vmem:[#allocation3] sm:$0xff] 0.0
    $region21: #{tpu_custom_call.1} parent=1 // pred_fallthru
      _
    %v128 = vld [vmem:[#allocation4] sm:$0xff]
    %v129 = vld [vmem:[%s100] sm:$0xff]
    %v130 = vld [vmem:[%s115] sm:$0xff]
    %v131 = vsub.f32 %v129, %v128
    %v132 = vand.u32 2147483647, %v131
    %v133 = vmul.f32 %v132, %v130
    %s134 = sadd.s32 0, 0
    %s135 = smul.u32 %s134, 8
    %v136 = vlaneseq
    %v137 = vshrl.u32 %v136, 7
    %s138 = ssub.s32 1, %s135
    %v139 = vstv %s138
    %vm140 = vcmp.lt.s32.totalorder %v137, %v139
    %v141 = vsel %vm140, %v133, 0.0
    %v142 = vsel %vm140, %v130, 0.0
    %v143 = vld [vmem:[#allocation2] sm:$0xff]
    %v144 = vadd.f32 %v141, 0.0
    %v145 = vadd.f32 %v143, %v144
    %146 = vst [vmem:[#allocation2] sm:$0xff] %v145
    %v147 = vld [vmem:[#allocation3] sm:$0xff]
    %v148 = vadd.f32 %v142, 0.0
    %v149 = vadd.f32 %v147, %v148
    %150 = vst [vmem:[#allocation3] sm:$0xff] %v149
    // Predicated region
    $region22: #{tpu_custom_call.1} parent=1 // pred_check
      %p151 = pneg %p122
    $region23: #{tpu_custom_call.1} parent=1 // pred_check_branch
      %153 = sbr.rel (%p151) target = $region25
    $region24: #{tpu_custom_call.1} parent=1 // pred_region
      %v154 = vld [vmem:[#allocation2] sm:$0xff]
      %155 = vadd.xlane.f32.xlu0 %v154
      %v156 = vpop.xlane.xlu0 %155
      %v157 = vrot.slane %v156, 4
      %v158 = vadd.f32 %v156, %v157
      %v159 = vrot.slane %v158, 2
      %v160 = vadd.f32 %v158, %v159
      %v161 = vrot.slane %v160, 1
      %v162 = vadd.f32 %v160, %v161
      %s163 = vtos %v162
      %s164 = scalar_lea.smem [#allocation7], 0
      %165 = sst [smem:[%s164]] %s163
      %v166 = vld [vmem:[#allocation3] sm:$0xff]
      %167 = vadd.xlane.f32.xlu0 %v166
      %v168 = vpop.xlane.xlu0 %167
      %v169 = vrot.slane %v168, 4
      %v170 = vadd.f32 %v168, %v169
      %v171 = vrot.slane %v170, 2
      %v172 = vadd.f32 %v170, %v171
      %v173 = vrot.slane %v172, 1
      %v174 = vadd.f32 %v172, %v173
      %s175 = vtos %v174
      %s176 = scalar_lea.smem [#allocation7], 1
      %177 = sst [smem:[%s176]] %s175
    $region25: #{tpu_custom_call.1} parent=1 // pred_fallthru
      _
    // Predicated region
    $region26: #{tpu_custom_call.1} parent=1 // pred_check
      _
    $region27: #{tpu_custom_call.1} parent=1 // pred_check_branch
      %179 = sbr.rel (0) target = $region29
    $region28: #{tpu_custom_call.1} parent=1 // pred_region
      %s181 = ssub.s32 16, 16
      %182 = vsyncadd [#allocation6], %s181
      %185 = dma.smem_to_hbm [#allocation7], 16, %s3, [#allocation6]
    $region29: #{tpu_custom_call.1} parent=1 // pred_fallthru
      _
    // Predicated region
    $region30: #{tpu_custom_call.1} parent=1 // pred_check
      _
    $region31: #{tpu_custom_call.1} parent=1 // pred_check_branch
      %187 = sbr.rel (0) target = $region33
    $region32: #{tpu_custom_call.1} parent=1 // pred_region
      %188 = dma.done [#allocation6], 16
    $region33: #{tpu_custom_call.1} parent=1 // pred_fallthru
      _
    %189 = sfence
    %190 = vsyncpa [#allocation5], 1
    %191 = vsyncpa [#allocation6], 1

</llo_original>
